<compile_context>
chip_gen: v6e
topology: v6e:2x2x1
jax: 0.10.0
libtpu: 0.0.40
codegen_flags: <defaults>
</compile_context>

<pallas_src>
import math

import jax
import jax.numpy as jnp
from jax.experimental import pallas as pl
from jax.experimental.pallas import tpu as pltpu

BN_EPS = 1e-5      # PyTorch BatchNorm1d default
N_OUT_PAD = 8      # final Linear's single output column, zero-padded to 8 lanes


# -----------------------------------------------------------------------------
# Kernel
# -----------------------------------------------------------------------------
def _make_kernel(H1, H2, H3):
    def joint_mlp_kernel(x_ref, w1_ref, w2_ref, w3_ref, w4_ref, brow_ref, b4_ref,
                         o_ref):
        """One batch tile: 3 x (bf16 matmul + f32 bias + ReLU) + small final matmul.

        x_ref:    [TM, F]           bf16
        w1..w3:   bf16 weights ([F,H1], [H1,H2], [H2,H3]); BN folded in.
        w4_ref:   [H3, 8]           bf16 (folded output weight in col 0, rest 0)
        brow_ref: [1, H1+H2+H3]     f32  (b1 | b2 | b3, BN folded in)
        b4_ref:   [1, 1]            f32 scalar in SMEM
        o_ref:    [TM, 8]           f32 (column 0 is the result)
        """
        x = x_ref[...]                                             # bf16
        b1 = brow_ref[:, 0:H1]
        b2 = brow_ref[:, H1:H1 + H2]
        b3 = brow_ref[:, H1 + H2:H1 + H2 + H3]

        h = jnp.dot(x, w1_ref[...], preferred_element_type=jnp.float32)
        h = jnp.maximum(h + b1, 0.0)

        h = jnp.dot(h.astype(jnp.bfloat16), w2_ref[...],
                    preferred_element_type=jnp.float32)
        h = jnp.maximum(h + b2, 0.0)

        h = jnp.dot(h.astype(jnp.bfloat16), w3_ref[...],
                    preferred_element_type=jnp.float32)
        h = jnp.maximum(h + b3, 0.0)                               # [TM, H3] f32

        # Final Linear(H3 -> 1), natural orientation (no transposed contraction,
        # no M=1 MXU pass).
        o = jnp.dot(h.astype(jnp.bfloat16), w4_ref[...],
                    preferred_element_type=jnp.float32)            # [TM, 8]
        o_ref[...] = o + b4_ref[0, 0]

    return joint_mlp_kernel


# -----------------------------------------------------------------------------
# Host-side parameter prep
# -----------------------------------------------------------------------------
def init_params(key, input_dim, hidden_dims=(256, 128, 64)):
    """Parameters matching nn.Linear default init; BN params/stats randomized so
    the BN folding is exercised non-trivially."""
    params = {"blocks": []}
    prev = input_dim
    for h in hidden_dims:
        key, kw, kb, kg, kbe, km, kv = jax.random.split(key, 7)
        bound = 1.0 / math.sqrt(prev)
        params["blocks"].append(dict(
            w=jax.random.uniform(kw, (prev, h), jnp.float32, -bound, bound),
            b=jax.random.uniform(kb, (1, h), jnp.float32, -bound, bound),
            gamma=jax.random.uniform(kg, (1, h), jnp.float32, 0.5, 1.5),
            beta=0.1 * jax.random.normal(kbe, (1, h), jnp.float32),
            mean=0.1 * jax.random.normal(km, (1, h), jnp.float32),
            var=jax.random.uniform(kv, (1, h), jnp.float32, 0.5, 1.5),
        ))
        prev = h
    key, kw, kb = jax.random.split(key, 3)
    bound = 1.0 / math.sqrt(prev)
    params["w_out"] = jax.random.uniform(kw, (prev, 1), jnp.float32, -bound, bound)
    params["b_out"] = jax.random.uniform(kb, (1, 1), jnp.float32, -bound, bound)
    return params


def fold_bn_params(params, eps=BN_EPS):
    """Fold eval-mode BN (applied AFTER ReLU of block i) into the NEXT Linear.

    y_i = ReLU(x W_i + b_i) * scale_i + shift_i, scale = gamma * rsqrt(var+eps),
                                                 shift = beta - mean * scale
    =>  y_i W_{i+1} + b_{i+1} = ReLU(x W_i + b_i) @ (diag(scale_i) W_{i+1})
                                + (shift_i @ W_{i+1} + b_{i+1})
    The last block's BN folds into (w_out, b_out).
    Returns folded weights [W1, W2', W3', Wout'] and biases (all [1, H]) in f32.
    """
    blocks = params["blocks"]
    Ws = [blocks[0]["w"]]
    bs = [blocks[0]["b"]]
    for i, p in enumerate(blocks):
        scale = p["gamma"] * jax.lax.rsqrt(p["var"] + eps)     # [1, H]
        shift = p["beta"] - p["mean"] * scale                  # [1, H]
        if i + 1 < len(blocks):
            w_next, b_next = blocks[i + 1]["w"], blocks[i + 1]["b"]
        else:
            w_next, b_next = params["w_out"], params["b_out"]
        Ws.append(scale.T * w_next)          # diag(scale) @ W_next
        bs.append(b_next + shift @ w_next)
    return Ws, bs


def _round_up(n, m):
    return ((n + m - 1) // m) * m


def _cdiv(a, b):
    return -(-a // b)


def _choose_tiling(B, tile_m):
    """Returns (TM, B_pad, num_tiles). Single tile for small B; otherwise balanced
    tiles so num_tiles = cdiv(B, tile_m) (>= 2 on the multi-tile path, keeping both
    v7x TensorCores busy) with minimal padding waste."""
    if B <= tile_m:
        TM = _round_up(max(B, 1), 16)
        return TM, TM, 1
    num_tiles = _cdiv(B, tile_m)
    TM = _round_up(_cdiv(B, num_tiles), 16)
    return TM, TM * num_tiles, num_tiles


# -----------------------------------------------------------------------------
# Plain-XLA folded path (small-batch dispatch + numerics reference)
# -----------------------------------------------------------------------------
def _folded_xla_forward(x, Ws, bs):
    """Mirrors the kernel's numerics (folded BN, bf16 matmuls, f32 accumulation)."""
    h = jnp.dot(x.astype(jnp.bfloat16), Ws[0].astype(jnp.bfloat16),
                preferred_element_type=jnp.float32)
    h = jnp.maximum(h + bs[0], 0.0)
    h = jnp.dot(h.astype(jnp.bfloat16), Ws[1].astype(jnp.bfloat16),
                preferred_element_type=jnp.float32)
    h = jnp.maximum(h + bs[1], 0.0)
    h = jnp.dot(h.astype(jnp.bfloat16), Ws[2].astype(jnp.bfloat16),
                preferred_element_type=jnp.float32)
    h = jnp.maximum(h + bs[2], 0.0)
    out = jnp.dot(h.astype(jnp.bfloat16), Ws[3].astype(jnp.bfloat16),
                  preferred_element_type=jnp.float32) + bs[3]
    return out[:, 0]


# -----------------------------------------------------------------------------
# Pallas wrapper
# -----------------------------------------------------------------------------
def joint_mlp_forward(x, params, *, tile_m=2048, small_batch_threshold=256):
    """Returns shape (B,), mirroring `.squeeze(-1)` of the PyTorch module (eval)."""
    B, F = x.shape
    Ws, bs = fold_bn_params(params)

    # Tiny batches: fixed pallas_call/DMA setup cost dominates -> plain XLA path.
    if B <= small_batch_threshold:
        return _folded_xla_forward(x, Ws, bs)

    H1, H2, H3 = Ws[0].shape[1], Ws[1].shape[1], Ws[2].shape[1]
    TM, B_pad, num_tiles = _choose_tiling(B, tile_m)

    # Host-side operand prep (done once per deployed model in practice).
    x_p = jnp.pad(x, ((0, B_pad - B), (0, 0))).astype(jnp.bfloat16)
    w1 = Ws[0].astype(jnp.bfloat16)
    w2 = Ws[1].astype(jnp.bfloat16)
    w3 = Ws[2].astype(jnp.bfloat16)
    w4 = jnp.pad(Ws[3], ((0, 0), (0, N_OUT_PAD - 1))).astype(jnp.bfloat16)  # [H3,8]
    brow = jnp.concatenate([bs[0], bs[1], bs[2]], axis=1)                   # [1,H1+H2+H3]
    b4 = bs[3].astype(jnp.float32)                                          # [1,1] SMEM

    flops = 2 * B_pad * (F * H1 + H1 * H2 + H2 * H3 + H3 * N_OUT_PAD)
    bytes_accessed = (x_p.size * 2
                      + (w1.size + w2.size + w3.size + w4.size) * 2
                      + (brow.size + b4.size) * 4
                      + B_pad * N_OUT_PAD * 4)

    out = pl.pallas_call(
        _make_kernel(H1, H2, H3),
        out_shape=jax.ShapeDtypeStruct((B_pad, N_OUT_PAD), jnp.float32),
        grid=(num_tiles,),
        in_specs=[
            pl.BlockSpec((TM, F), lambda i: (i, 0)),         # x tile (pipelined)
            pl.BlockSpec((F, H1), lambda i: (0, 0)),         # resident weights
            pl.BlockSpec((H1, H2), lambda i: (0, 0)),
            pl.BlockSpec((H2, H3), lambda i: (0, 0)),
            pl.BlockSpec((H3, N_OUT_PAD), lambda i: (0, 0)),
            pl.BlockSpec((1, H1 + H2 + H3), lambda i: (0, 0)),   # b1|b2|b3 row
            pl.BlockSpec((1, 1), lambda i: (0, 0),
                         memory_space=pltpu.MemorySpace.SMEM),   # b4 scalar
        ],
        out_specs=pl.BlockSpec((TM, N_OUT_PAD), lambda i: (i, 0)),
        compiler_params=pltpu.CompilerParams(
            dimension_semantics=("parallel",),
            vmem_limit_bytes=32 * 1024 * 1024),
        cost_estimate=pl.CostEstimate(
            flops=int(flops), transcendentals=0,
            bytes_accessed=int(bytes_accessed)),
    )(x_p, w1, w2, w3, w4, brow, b4)

    return out[:B, 0]


# -----------------------------------------------------------------------------
# Pure-JAX f32 reference (exact eval-mode PyTorch semantics)
# -----------------------------------------------------------------------------
def joint_mlp_reference(x, params):
    h = x
    for p in params["blocks"]:
        z = h @ p["w"] + p["b"]
        z = jnp.maximum(z, 0.0)
        z = (z - p["mean"]) * jax.lax.rsqrt(p["var"] + BN_EPS) * p["gamma"] + p["beta"]
        h = z                                   # Dropout: identity at inference
    return (h @ params["w_out"] + params["b_out"])[:, 0]


# -----------------------------------------------------------------------------
# Test
# -----------------------------------------------------------------------------
if __name__ == "__main__":
    key = jax.random.PRNGKey(0)
    key, kp, kx = jax.random.split(key, 3)

    INPUT_DIM = 16
    BATCH = 8

    params = init_params(kp, INPUT_DIM)
    Ws, bs = fold_bn_params(params)

    # --- Small batch: force the Pallas kernel (single-tile path). ---
    x = jax.random.normal(kx, (BATCH, INPUT_DIM), jnp.float32)
    y = jax.block_until_ready(joint_mlp_forward(x, params, small_batch_threshold=0))
    assert y.shape == (BATCH,), y.shape

    y_folded = jax.block_until_ready(_folded_xla_forward(x, Ws, bs))
    assert jnp.allclose(y, y_folded, atol=5e-3, rtol=5e-3), (y, y_folded)

    y_f32 = jax.block_until_ready(joint_mlp_reference(x, params))
    assert jnp.allclose(y, y_f32, atol=3e-2, rtol=3e-2), (y, y_f32)

    # Default dispatch for tiny batches goes to the plain XLA folded path.
    y_disp = jax.block_until_ready(joint_mlp_forward(x, params))
    assert jnp.allclose(y_disp, y_f32, atol=3e-2, rtol=3e-2), (y_disp, y_f32)

    # --- Multi-tile path with balanced tiles (grid=3, padding exercised). ---
    key, kx2 = jax.random.split(key)
    x2 = jax.random.normal(kx2, (600, INPUT_DIM), jnp.float32)
    y2 = jax.block_until_ready(joint_mlp_forward(x2, params, tile_m=256))
    y2_f32 = jax.block_until_ready(joint_mlp_reference(x2, params))
    assert y2.shape == (600,), y2.shape
    assert jnp.allclose(y2, y2_f32, atol=3e-2, rtol=3e-2)

    # --- Default tile_m=2048 multi-tile path (2 balanced tiles). ---
    key, kx3 = jax.random.split(key)
    x3 = jax.random.normal(kx3, (2304, INPUT_DIM), jnp.float32)
    y3 = jax.block_until_ready(joint_mlp_forward(x3, params))
    y3_f32 = jax.block_until_ready(joint_mlp_reference(x3, params))
    assert y3.shape == (2304,), y3.shape
    assert jnp.allclose(y3, y3_f32, atol=3e-2, rtol=3e-2)

    print("KERNEL_OK")
</pallas_src>

<mosaic_0001>
module attributes {stable_mosaic.version = 11 : i64} {
  func.func @joint_mlp_kernel(%arg0: i32, %arg1: memref<16x16xbf16, #tpu.memory_space<vmem>>, %arg2: memref<16x256xbf16, #tpu.memory_space<vmem>>, %arg3: memref<256x128xbf16, #tpu.memory_space<vmem>>, %arg4: memref<128x64xbf16, #tpu.memory_space<vmem>>, %arg5: memref<64x8xbf16, #tpu.memory_space<vmem>>, %arg6: memref<1x448xf32, #tpu.memory_space<vmem>>, %arg7: memref<1x1xf32, #tpu.memory_space<smem>>, %arg8: memref<16x8xf32, #tpu.memory_space<vmem>>) attributes {dimension_semantics = [#tpu.dimension_semantics<parallel>], iteration_bounds = array<i64: 1>, scalar_prefetch = 0 : i64, scratch_operands = 0 : i64, tpu.core_type = #tpu.core_type<tc>, window_params = [{transform_indices = @transform_0, window_bounds = array<i64: 16, 16>}, {pipeline_mode = #tpu.pipeline_mode<synchronous>, transform_indices = @transform_1, window_bounds = array<i64: 16, 256>}, {pipeline_mode = #tpu.pipeline_mode<synchronous>, transform_indices = @transform_2, window_bounds = array<i64: 256, 128>}, {pipeline_mode = #tpu.pipeline_mode<synchronous>, transform_indices = @transform_3, window_bounds = array<i64: 128, 64>}, {pipeline_mode = #tpu.pipeline_mode<synchronous>, transform_indices = @transform_4, window_bounds = array<i64: 64, 8>}, {pipeline_mode = #tpu.pipeline_mode<synchronous>, transform_indices = @transform_5, window_bounds = array<i64: 1, 448>}, {transform_indices = @transform_6, window_bounds = array<i64: 1, 1>}, {transform_indices = @transform_7, window_bounds = array<i64: 16, 8>}]} {
    %c0 = arith.constant 0 : index
    %c0_0 = arith.constant 0 : index
    %0 = vector.load %arg1[%c0, %c0_0] : memref<16x16xbf16, #tpu.memory_space<vmem>>, vector<16x16xbf16>
    %c0_1 = arith.constant 0 : index
    %c0_2 = arith.constant 0 : index
    %1 = vector.load %arg6[%c0_1, %c0_2] : memref<1x448xf32, #tpu.memory_space<vmem>>, vector<1x256xf32>
    %c0_3 = arith.constant 0 : index
    %c256 = arith.constant 256 : index
    %2 = vector.load %arg6[%c0_3, %c256] : memref<1x448xf32, #tpu.memory_space<vmem>>, vector<1x128xf32>
    %c0_4 = arith.constant 0 : index
    %c384 = arith.constant 384 : index
    %3 = vector.load %arg6[%c0_4, %c384] : memref<1x448xf32, #tpu.memory_space<vmem>>, vector<1x64xf32>
    %c0_5 = arith.constant 0 : index
    %c0_6 = arith.constant 0 : index
    %4 = vector.load %arg2[%c0_5, %c0_6] : memref<16x256xbf16, #tpu.memory_space<vmem>>, vector<16x256xbf16>
    %cst = arith.constant dense<0.000000e+00> : vector<16x256xf32>
    %5 = tpu.matmul %0, %4, %cst {dimension_numbers = #tpu.dot_dimension_numbers<[1], [0], [0], [1], [0, 0, 1, 1], [], []>} : vector<16x16xbf16>, vector<16x256xbf16>, vector<16x256xf32> -> vector<16x256xf32>
    %6 = vector.broadcast %1 : vector<1x256xf32> to vector<16x256xf32>
    %7 = arith.addf %5, %6 : vector<16x256xf32>
    %cst_7 = arith.constant 0.000000e+00 : f32
    %8 = vector.broadcast %cst_7 : f32 to vector<16x256xf32>
    %9 = arith.maximumf %7, %8 : vector<16x256xf32>
    %10 = arith.truncf %9 : vector<16x256xf32> to vector<16x256xbf16>
    %c0_8 = arith.constant 0 : index
    %c0_9 = arith.constant 0 : index
    %11 = vector.load %arg3[%c0_8, %c0_9] : memref<256x128xbf16, #tpu.memory_space<vmem>>, vector<256x128xbf16>
    %cst_10 = arith.constant dense<0.000000e+00> : vector<16x128xf32>
    %12 = tpu.matmul %10, %11, %cst_10 {dimension_numbers = #tpu.dot_dimension_numbers<[1], [0], [0], [1], [0, 0, 1, 1], [], []>} : vector<16x256xbf16>, vector<256x128xbf16>, vector<16x128xf32> -> vector<16x128xf32>
    %13 = vector.broadcast %2 : vector<1x128xf32> to vector<16x128xf32>
    %14 = arith.addf %12, %13 : vector<16x128xf32>
    %cst_11 = arith.constant 0.000000e+00 : f32
    %15 = vector.broadcast %cst_11 : f32 to vector<16x128xf32>
    %16 = arith.maximumf %14, %15 : vector<16x128xf32>
    %17 = arith.truncf %16 : vector<16x128xf32> to vector<16x128xbf16>
    %c0_12 = arith.constant 0 : index
    %c0_13 = arith.constant 0 : index
    %18 = vector.load %arg4[%c0_12, %c0_13] : memref<128x64xbf16, #tpu.memory_space<vmem>>, vector<128x64xbf16>
    %cst_14 = arith.constant dense<0.000000e+00> : vector<16x64xf32>
    %19 = tpu.matmul %17, %18, %cst_14 {dimension_numbers = #tpu.dot_dimension_numbers<[1], [0], [0], [1], [0, 0, 1, 1], [], []>} : vector<16x128xbf16>, vector<128x64xbf16>, vector<16x64xf32> -> vector<16x64xf32>
    %20 = vector.broadcast %3 : vector<1x64xf32> to vector<16x64xf32>
    %21 = arith.addf %19, %20 : vector<16x64xf32>
    %cst_15 = arith.constant 0.000000e+00 : f32
    %22 = vector.broadcast %cst_15 : f32 to vector<16x64xf32>
    %23 = arith.maximumf %21, %22 : vector<16x64xf32>
    %24 = arith.truncf %23 : vector<16x64xf32> to vector<16x64xbf16>
    %c0_16 = arith.constant 0 : index
    %c0_17 = arith.constant 0 : index
    %25 = vector.load %arg5[%c0_16, %c0_17] : memref<64x8xbf16, #tpu.memory_space<vmem>>, vector<64x8xbf16>
    %cst_18 = arith.constant dense<0.000000e+00> : vector<16x8xf32>
    %26 = tpu.matmul %24, %25, %cst_18 {dimension_numbers = #tpu.dot_dimension_numbers<[1], [0], [0], [1], [0, 0, 1, 1], [], []>} : vector<16x64xbf16>, vector<64x8xbf16>, vector<16x8xf32> -> vector<16x8xf32>
    %c0_19 = arith.constant 0 : index
    %c0_20 = arith.constant 0 : index
    %27 = memref.load %arg7[%c0_19, %c0_20] : memref<1x1xf32, #tpu.memory_space<smem>>
    %28 = vector.broadcast %27 : f32 to vector<16x8xf32>
    %29 = arith.addf %26, %28 : vector<16x8xf32>
    %c0_21 = arith.constant 0 : index
    %c0_22 = arith.constant 0 : index
    %30 = vector.load %arg8[%c0_21, %c0_22] : memref<16x8xf32, #tpu.memory_space<vmem>>, vector<16x8xf32>
    tpu.vector_store %arg8[%c0_21, %c0_22], %29 {strides = array<i32>} : memref<16x8xf32, #tpu.memory_space<vmem>>, vector<16x8xf32>,
    return
  }
  func.func @transform_0(%arg0: i32) -> (i32, i32) {
    %c0_i32 = arith.constant 0 : i32
    %c0_i32_0 = arith.constant 0 : i32
    return %arg0, %c0_i32 : i32, i32
  }
  func.func @transform_1(%arg0: i32) -> (i32, i32) {
    %c0_i32 = arith.constant 0 : i32
    %c0_i32_0 = arith.constant 0 : i32
    %c0_i32_1 = arith.constant 0 : i32
    return %c0_i32, %c0_i32_0 : i32, i32
  }
  func.func @transform_2(%arg0: i32) -> (i32, i32) {
    %c0_i32 = arith.constant 0 : i32
    %c0_i32_0 = arith.constant 0 : i32
    %c0_i32_1 = arith.constant 0 : i32
    return %c0_i32, %c0_i32_0 : i32, i32
  }
  func.func @transform_3(%arg0: i32) -> (i32, i32) {
    %c0_i32 = arith.constant 0 : i32
    %c0_i32_0 = arith.constant 0 : i32
    %c0_i32_1 = arith.constant 0 : i32
    return %c0_i32, %c0_i32_0 : i32, i32
  }
  func.func @transform_4(%arg0: i32) -> (i32, i32) {
    %c0_i32 = arith.constant 0 : i32
    %c0_i32_0 = arith.constant 0 : i32
    %c0_i32_1 = arith.constant 0 : i32
    return %c0_i32, %c0_i32_0 : i32, i32
  }
  func.func @transform_5(%arg0: i32) -> (i32, i32) {
    %c0_i32 = arith.constant 0 : i32
    %c0_i32_0 = arith.constant 0 : i32
    %c0_i32_1 = arith.constant 0 : i32
    return %c0_i32, %c0_i32_0 : i32, i32
  }
  func.func @transform_6(%arg0: i32) -> (i32, i32) {
    %c0_i32 = arith.constant 0 : i32
    %c0_i32_0 = arith.constant 0 : i32
    %c0_i32_1 = arith.constant 0 : i32
    return %c0_i32, %c0_i32_0 : i32, i32
  }
  func.func @transform_7(%arg0: i32) -> (i32, i32) {
    %c0_i32 = arith.constant 0 : i32
    %c0_i32_0 = arith.constant 0 : i32
    return %arg0, %c0_i32 : i32, i32
  }
}

</mosaic_0001>

<llo_original>
// kernel: tpu_custom_call.1
$region0: #{tpu_custom_call.1}
  #allocation0 [shape = 'u32[]', space=smem, size = 0x4, offset = 0x4, fixed_abs, tag = 'smem constant byte address 0x4 - core index']
  #allocation1 [shape = 'u32[144,128]{1,0:T(1,128)}', space=vmem, size = 0x12000, scoped, tag = 'internal scratch']
  #allocation2 [shape = 'f32[1,1]{1,0:T(1,128)S(6)}', space=smem, size = 0x200, scoped, tag = 'scoped memory for tpu_custom_call.1']
  %s0 = inlined_call_operand.vmem [shape: bf16[16,16], index: 0, kind: input, shape index: {}]
  %s1 = inlined_call_operand.hbm [shape: bf16[16,256], index: 1, kind: input, shape index: {}]
  %s2 = inlined_call_operand.vmem [shape: bf16[256,128], index: 2, kind: input, shape index: {}]
  %s3 = inlined_call_operand.vmem [shape: bf16[128,64], index: 3, kind: input, shape index: {}]
  %s4 = inlined_call_operand.vmem [shape: bf16[64,8], index: 4, kind: input, shape index: {}]
  %s5 = inlined_call_operand.hbm [shape: f32[1,448], index: 5, kind: input, shape index: {}]
  %s6 = inlined_call_operand.<no memory space> [shape: f32[1,1], index: 6, kind: input, shape index: {}]
  %s7 = inlined_call_operand.vmem [shape: f32[16,8], index: 7, kind: output, shape index: {}]
  %s8 = sld [smem:[#allocation0]]
  $region46: #{tpu_custom_call.1} parent=0
    _
  %s10 = ssub.s32 1, %s8
  %s11 = scalar_select 0, %s10, %s8
  %12 = sst [smem:[#allocation2]] %s6
  $region1: #{tpu_custom_call.1} parent=0
    #allocation3 [shape = 'u8[8192]{0}', space=vmem, size = 0x2000, scoped, tag = 'input window, operand 1, single buffered']
    #allocation4 [shape = 's32[1]{0}', space=sflag, size = 0x4, scoped, tag = 'scoped memory for tpu_custom_call.1']
    #allocation5 [shape = 'u8[2048]{0}', space=vmem, size = 0x800, scoped, tag = 'input window, operand 5, single buffered']
    #allocation6 [shape = 's32[1]{0}', space=sflag, size = 0x4, scoped, tag = 'scoped memory for tpu_custom_call.1']
    %13 = vsyncpa [#allocation4], 0
    %14 = vsyncpa [#allocation6], 0
    // Predicated region
    $region2: #{tpu_custom_call.1} parent=1 // pred_check
      _
    $region3: #{tpu_custom_call.1} parent=1 // pred_check_branch
      %16 = sbr.rel (0) target = $region5
    $region4: #{tpu_custom_call.1} parent=1 // pred_region
      _
    $region5: #{tpu_custom_call.1} parent=1 // pred_fallthru
      _
    // Predicated region
    $region6: #{tpu_custom_call.1} parent=1 // pred_check
      _
    $region7: #{tpu_custom_call.1} parent=1 // pred_check_branch
      %18 = sbr.rel (0) target = $region9
    $region8: #{tpu_custom_call.1} parent=1 // pred_region
      %s20 = ssub.s32 256, 256
      %21 = vsyncadd [#allocation4], %s20
      %s22 = sshll.u32 [#allocation3], 4
      %s23 = int_to_ptr.vmem [resolvable:$true] %s22
      %28 = dma.hbm_to_vmem [thread:$0]  %s1, 256, %s23, [#allocation4], 128, 128, 8
    $region9: #{tpu_custom_call.1} parent=1 // pred_fallthru
      _
    // Predicated region
    $region10: #{tpu_custom_call.1} parent=1 // pred_check
      _
    $region11: #{tpu_custom_call.1} parent=1 // pred_check_branch
      %30 = sbr.rel (0) target = $region13
    $region12: #{tpu_custom_call.1} parent=1 // pred_region
      _
    $region13: #{tpu_custom_call.1} parent=1 // pred_fallthru
      _
    // Predicated region
    $region14: #{tpu_custom_call.1} parent=1 // pred_check
      _
    $region15: #{tpu_custom_call.1} parent=1 // pred_check_branch
      %32 = sbr.rel (0) target = $region17
    $region16: #{tpu_custom_call.1} parent=1 // pred_region
      _
    $region17: #{tpu_custom_call.1} parent=1 // pred_fallthru
      _
    // Predicated region
    $region18: #{tpu_custom_call.1} parent=1 // pred_check
      _
    $region19: #{tpu_custom_call.1} parent=1 // pred_check_branch
      %34 = sbr.rel (0) target = $region21
    $region20: #{tpu_custom_call.1} parent=1 // pred_region
      _
    $region21: #{tpu_custom_call.1} parent=1 // pred_fallthru
      _
    // Predicated region
    $region22: #{tpu_custom_call.1} parent=1 // pred_check
      _
    $region23: #{tpu_custom_call.1} parent=1 // pred_check_branch
      %36 = sbr.rel (0) target = $region25
    $region24: #{tpu_custom_call.1} parent=1 // pred_region
      %s38 = ssub.s32 64, 64
      %39 = vsyncadd [#allocation6], %s38
      %s41 = sshll.u32 [#allocation5], 4
      %s42 = int_to_ptr.vmem [resolvable:$true] %s41
      %44 = dma.hbm_to_vmem [thread:$0]  %s5, 64, %s42, [#allocation6]
    $region25: #{tpu_custom_call.1} parent=1 // pred_fallthru
      _
    // Predicated region
    $region26: #{tpu_custom_call.1} parent=1 // pred_check
      _
    $region27: #{tpu_custom_call.1} parent=1 // pred_check_branch
      %46 = sbr.rel (0) target = $region29
    $region28: #{tpu_custom_call.1} parent=1 // pred_region
      _
    $region29: #{tpu_custom_call.1} parent=1 // pred_fallthru
      _
    // Predicated region
    $region30: #{tpu_custom_call.1} parent=1 // pred_check
      _
    $region31: #{tpu_custom_call.1} parent=1 // pred_check_branch
      %48 = sbr.rel (0) target = $region33
    $region32: #{tpu_custom_call.1} parent=1 // pred_region
      %49 = dma.done [#allocation4], 256
    $region33: #{tpu_custom_call.1} parent=1 // pred_fallthru
      _
    // Predicated region
    $region34: #{tpu_custom_call.1} parent=1 // pred_check
      _
    $region35: #{tpu_custom_call.1} parent=1 // pred_check_branch
      %51 = sbr.rel (0) target = $region37
    $region36: #{tpu_custom_call.1} parent=1 // pred_region
      %52 = dma.done [#allocation6], 64
    $region37: #{tpu_custom_call.1} parent=1 // pred_fallthru
      _
    %v54 = vld [vmem:[%s0] sm:$0xf]
    %v55 = vld [vmem:[%s0 + $0x4] sm:$0xf]
    %v56 = vld [vmem:[#allocation5] sm:$0x3]
    %v57 = vld [vmem:[#allocation5 + $0x2] sm:$0x1]
    %v58 = vld [vmem:[#allocation5 + $0x3] sm:$0x1]
    %v59 = vld [vmem:[#allocation3] sm:$0xff]
    %v60 = vld [vmem:[#allocation3 + $0x8] sm:$0xff]
    %v62 = vlaneseq
    %v63 = vshrl.u32 %v62, 7
    %v64 = vsub.s32 0, %v63
    %v65 = vrot.slane %v56, %v64
    %v66 = vlaneseq
    %v67 = vshrl.u32 %v66, 7
    %v68 = vsub.s32 1, %v67
    %v69 = vrot.slane %v56, %v68
    %v74 = vunpack.c.l.b16 %v54
    %v75 = vunpack.c.l.b16 %v55
    %v76 = vpack.c.b16 %v75, %v74
    %v79 = vunpack.c.l.b16 %v59
    %v80 = vunpack.c.h.b16 %v59
    %v81 = vunpack.c.l.b16 %v60
    %v82 = vunpack.c.h.b16 %v60
    %v83 = vpack.c.b16 %v81, %v79
    %v84 = vpack.c.b16 %v82, %v80
    %vm87 = vcmask 130048
    %v89 = vsel %vm87, %v76, 0
    %91 = vmatprep.subr.bf16.mxu0 0
    %92 = vmatpush1.bf16.msra.mxu0 0
    %93 = vmatprep.subr.bf16.mxu0 0
    %94 = vmatpush1.bf16.msra.mxu0 0
    %95 = vmatprep.subr.bf16.mxu0 0
    %96 = vmatpush1.bf16.msra.mxu0 0
    %97 = vmatprep.subr.bf16.mxu0 0
    %98 = vmatpush1.bf16.msra.mxu0 0
    %99 = vmatprep.subr.bf16.mxu0 0
    %100 = vmatpush1.bf16.msra.mxu0 0
    %101 = vmatprep.subr.bf16.mxu0 0
    %102 = vmatpush1.bf16.msra.mxu0 0
    %103 = vmatprep.subr.bf16.mxu0 0
    %104 = vmatpush1.bf16.msra.mxu0 0
    %105 = vmatprep.subr.bf16.mxu0 %v84
    %106 = vmatpush1.bf16.msra.mxu0 %v83
    %107 = vmatprep.subr.bf16.mxu0 0
    %108 = vmatpush2.bf16.msra.mxu0 0
    %109 = vmatprep.subr.bf16.mxu0 0
    %110 = vmatpush2.bf16.msra.mxu0 0
    %111 = vmatprep.subr.bf16.mxu0 0
    %112 = vmatpush2.bf16.msra.mxu0 0
    %113 = vmatprep.subr.bf16.mxu0 0
    %114 = vmatpush2.bf16.msra.mxu0 0
    %115 = vmatprep.subr.bf16.mxu0 0
    %116 = vmatpush2.bf16.msra.mxu0 0
    %117 = vmatprep.subr.bf16.mxu0 0
    %118 = vmatpush2.bf16.msra.mxu0 0
    %119 = vmatprep.subr.bf16.mxu0 0
    %120 = vmatpush2.bf16.msra.mxu0 0
    %121 = vmatprep.subr.bf16.mxu0 0
    %122 = vmatpush2.bf16.msra.mxu0 0
    %123 = vmatprep.mubr.bf16.mxu0 0
    %124 = vmatmul.mubr.bf16.gmra.mxu0 %v89
    %v125 = vpop.f32.mrf.mxu0
    %v126 = vadd.f32 %v65, %v125
    %v127 = vpop.f32.mrf.mxu0
    %v128 = vadd.f32 %v69, %v127
    %v129 = vpop.f32.mrf.mxu0
    %v130 = vadd.f32 %v65, %v129
    %v131 = vpop.f32.mrf.mxu0
    %v132 = vadd.f32 %v69, %v131
    %133 = vdwg.mxu0
    %v134 = vmax.f32 %v126, 0.0
    %v135 = vmax.f32 %v128, 0.0
    %v136 = vmax.f32 %v130, 0.0
    %v137 = vmax.f32 %v132, 0.0
    %v138 = vpack.c.bf16 %v136, %v134
    %v139 = vpack.c.bf16 %v137, %v135
    %v140 = vld [vmem:[%s2] sm:$0xf]
    %v141 = vld [vmem:[%s2 + $0x4] sm:$0xf]
    %v142 = vld [vmem:[%s2 + $0x8] sm:$0xf]
    %v143 = vld [vmem:[%s2 + $0xc] sm:$0xf]
    %v144 = vld [vmem:[%s2 + $0x10] sm:$0xf]
    %v145 = vld [vmem:[%s2 + $0x14] sm:$0xf]
    %v146 = vld [vmem:[%s2 + $0x18] sm:$0xf]
    %v147 = vld [vmem:[%s2 + $0x1c] sm:$0xf]
    %v148 = vld [vmem:[%s2 + $0x20] sm:$0xf]
    %v149 = vld [vmem:[%s2 + $0x24] sm:$0xf]
    %v150 = vld [vmem:[%s2 + $0x28] sm:$0xf]
    %v151 = vld [vmem:[%s2 + $0x2c] sm:$0xf]
    %v152 = vld [vmem:[%s2 + $0x30] sm:$0xf]
    %v153 = vld [vmem:[%s2 + $0x34] sm:$0xf]
    %v154 = vld [vmem:[%s2 + $0x38] sm:$0xf]
    %v155 = vld [vmem:[%s2 + $0x3c] sm:$0xf]
    %v156 = vld [vmem:[%s2 + $0x40] sm:$0xf]
    %v157 = vld [vmem:[%s2 + $0x44] sm:$0xf]
    %v158 = vld [vmem:[%s2 + $0x48] sm:$0xf]
    %v159 = vld [vmem:[%s2 + $0x4c] sm:$0xf]
    %v160 = vld [vmem:[%s2 + $0x50] sm:$0xf]
    %v161 = vld [vmem:[%s2 + $0x54] sm:$0xf]
    %v162 = vld [vmem:[%s2 + $0x58] sm:$0xf]
    %v163 = vld [vmem:[%s2 + $0x5c] sm:$0xf]
    %v164 = vld [vmem:[%s2 + $0x60] sm:$0xf]
    %v165 = vld [vmem:[%s2 + $0x64] sm:$0xf]
    %v166 = vld [vmem:[%s2 + $0x68] sm:$0xf]
    %v167 = vld [vmem:[%s2 + $0x6c] sm:$0xf]
    %v168 = vld [vmem:[%s2 + $0x70] sm:$0xf]
    %v169 = vld [vmem:[%s2 + $0x74] sm:$0xf]
    %v170 = vld [vmem:[%s2 + $0x78] sm:$0xf]
    %v171 = vld [vmem:[%s2 + $0x7c] sm:$0xf]
    %v173 = vlaneseq
    %v174 = vshrl.u32 %v173, 7
    %v175 = vsub.s32 0, %v174
    %v176 = vrot.slane %v57, %v175
    %v210 = vunpack.c.l.b16 %v140
    %v211 = vunpack.c.l.b16 %v141
    %v212 = vunpack.c.l.b16 %v142
    %v213 = vunpack.c.l.b16 %v143
    %v214 = vunpack.c.l.b16 %v144
    %v215 = vunpack.c.l.b16 %v145
    %v216 = vunpack.c.l.b16 %v146
    %v217 = vunpack.c.l.b16 %v147
    %v218 = vunpack.c.l.b16 %v148
    %v219 = vunpack.c.l.b16 %v149
    %v220 = vunpack.c.l.b16 %v150
    %v221 = vunpack.c.l.b16 %v151
    %v222 = vunpack.c.l.b16 %v152
    %v223 = vunpack.c.l.b16 %v153
    %v224 = vunpack.c.l.b16 %v154
    %v225 = vunpack.c.l.b16 %v155
    %v226 = vunpack.c.l.b16 %v156
    %v227 = vunpack.c.l.b16 %v157
    %v228 = vunpack.c.l.b16 %v158
    %v229 = vunpack.c.l.b16 %v159
    %v230 = vunpack.c.l.b16 %v160
    %v231 = vunpack.c.l.b16 %v161
    %v232 = vunpack.c.l.b16 %v162
    %v233 = vunpack.c.l.b16 %v163
    %v234 = vunpack.c.l.b16 %v164
    %v235 = vunpack.c.l.b16 %v165
    %v236 = vunpack.c.l.b16 %v166
    %v237 = vunpack.c.l.b16 %v167
    %v238 = vunpack.c.l.b16 %v168
    %v239 = vunpack.c.l.b16 %v169
    %v240 = vunpack.c.l.b16 %v170
    %v241 = vunpack.c.l.b16 %v171
    %v242 = vpack.c.b16 %v211, %v210
    %v243 = vpack.c.b16 %v213, %v212
    %v244 = vpack.c.b16 %v215, %v214
    %v245 = vpack.c.b16 %v217, %v216
    %v246 = vpack.c.b16 %v219, %v218
    %v247 = vpack.c.b16 %v221, %v220
    %v248 = vpack.c.b16 %v223, %v222
    %v249 = vpack.c.b16 %v225, %v224
    %v250 = vpack.c.b16 %v227, %v226
    %v251 = vpack.c.b16 %v229, %v228
    %v252 = vpack.c.b16 %v231, %v230
    %v253 = vpack.c.b16 %v233, %v232
    %v254 = vpack.c.b16 %v235, %v234
    %v255 = vpack.c.b16 %v237, %v236
    %v256 = vpack.c.b16 %v239, %v238
    %v257 = vpack.c.b16 %v241, %v240
    %274 = vmatprep.subr.bf16.mxu0 0
    %275 = vmatpush1.bf16.msra.mxu0 %v249
    %276 = vmatprep.subr.bf16.mxu0 0
    %277 = vmatpush1.bf16.msra.mxu0 %v248
    %278 = vmatprep.subr.bf16.mxu0 0
    %279 = vmatpush1.bf16.msra.mxu0 %v247
    %280 = vmatprep.subr.bf16.mxu0 0
    %281 = vmatpush1.bf16.msra.mxu0 %v246
    %282 = vmatprep.subr.bf16.mxu0 0
    %283 = vmatpush1.bf16.msra.mxu0 %v245
    %284 = vmatprep.subr.bf16.mxu0 0
    %285 = vmatpush1.bf16.msra.mxu0 %v244
    %286 = vmatprep.subr.bf16.mxu0 0
    %287 = vmatpush1.bf16.msra.mxu0 %v243
    %288 = vmatprep.subr.bf16.mxu0 0
    %289 = vmatpush1.bf16.msra.mxu0 %v242
    %290 = vmatprep.subr.bf16.mxu0 0
    %291 = vmatpush2.bf16.msra.mxu0 %v257
    %292 = vmatprep.subr.bf16.mxu0 0
    %293 = vmatpush2.bf16.msra.mxu0 %v256
    %294 = vmatprep.subr.bf16.mxu0 0
    %295 = vmatpush2.bf16.msra.mxu0 %v255
    %296 = vmatprep.subr.bf16.mxu0 0
    %297 = vmatpush2.bf16.msra.mxu0 %v254
    %298 = vmatprep.subr.bf16.mxu0 0
    %299 = vmatpush2.bf16.msra.mxu0 %v253
    %300 = vmatprep.subr.bf16.mxu0 0
    %301 = vmatpush2.bf16.msra.mxu0 %v252
    %302 = vmatprep.subr.bf16.mxu0 0
    %303 = vmatpush2.bf16.msra.mxu0 %v251
    %304 = vmatprep.subr.bf16.mxu0 0
    %305 = vmatpush2.bf16.msra.mxu0 %v250
    %306 = vmatprep.mubr.bf16.mxu0 %v139
    %307 = vmatmul.mubr.bf16.gmra.mxu0 %v138
    %v308 = vpop.f32.mrf.mxu0
    %v309 = vadd.f32 %v176, %v308
    %v310 = vpop.f32.mrf.mxu0
    %v311 = vpop.f32.mrf.mxu0
    %v312 = vadd.f32 %v176, %v311
    %v313 = vpop.f32.mrf.mxu0
    %314 = vdwg.mxu0
    %v315 = vmax.f32 %v309, 0.0
    %v316 = vmax.f32 %v312, 0.0
    %v317 = vpack.c.bf16 %v316, %v315
    %v318 = vld [vmem:[%s3] sm:$0xf]
    %v319 = vld [vmem:[%s3 + $0x4] sm:$0xf]
    %v320 = vld [vmem:[%s3 + $0x8] sm:$0xf]
    %v321 = vld [vmem:[%s3 + $0xc] sm:$0xf]
    %v322 = vld [vmem:[%s3 + $0x10] sm:$0xf]
    %v323 = vld [vmem:[%s3 + $0x14] sm:$0xf]
    %v324 = vld [vmem:[%s3 + $0x18] sm:$0xf]
    %v325 = vld [vmem:[%s3 + $0x1c] sm:$0xf]
    %v326 = vld [vmem:[%s3 + $0x20] sm:$0xf]
    %v327 = vld [vmem:[%s3 + $0x24] sm:$0xf]
    %v328 = vld [vmem:[%s3 + $0x28] sm:$0xf]
    %v329 = vld [vmem:[%s3 + $0x2c] sm:$0xf]
    %v330 = vld [vmem:[%s3 + $0x30] sm:$0xf]
    %v331 = vld [vmem:[%s3 + $0x34] sm:$0xf]
    %v332 = vld [vmem:[%s3 + $0x38] sm:$0xf]
    %v333 = vld [vmem:[%s3 + $0x3c] sm:$0xf]
    %v335 = vlaneseq
    %v336 = vshrl.u32 %v335, 7
    %v337 = vsub.s32 0, %v336
    %v338 = vrot.slane %v58, %v337
    %v356 = vunpack.c.l.b16 %v318
    %v357 = vunpack.c.l.b16 %v319
    %v358 = vunpack.c.l.b16 %v320
    %v359 = vunpack.c.l.b16 %v321
    %v360 = vunpack.c.l.b16 %v322
    %v361 = vunpack.c.l.b16 %v323
    %v362 = vunpack.c.l.b16 %v324
    %v363 = vunpack.c.l.b16 %v325
    %v364 = vunpack.c.l.b16 %v326
    %v365 = vunpack.c.l.b16 %v327
    %v366 = vunpack.c.l.b16 %v328
    %v367 = vunpack.c.l.b16 %v329
    %v368 = vunpack.c.l.b16 %v330
    %v369 = vunpack.c.l.b16 %v331
    %v370 = vunpack.c.l.b16 %v332
    %v371 = vunpack.c.l.b16 %v333
    %v372 = vpack.c.b16 %v357, %v356
    %v373 = vpack.c.b16 %v359, %v358
    %v374 = vpack.c.b16 %v361, %v360
    %v375 = vpack.c.b16 %v363, %v362
    %v376 = vpack.c.b16 %v365, %v364
    %v377 = vpack.c.b16 %v367, %v366
    %v378 = vpack.c.b16 %v369, %v368
    %v379 = vpack.c.b16 %v371, %v370
    %388 = vmatprep.subr.bf16.mxu0 0
    %389 = vmatpush1.bf16.msra.mxu0 %v379
    %390 = vmatprep.subr.bf16.mxu0 0
    %391 = vmatpush1.bf16.msra.mxu0 %v378
    %392 = vmatprep.subr.bf16.mxu0 0
    %393 = vmatpush1.bf16.msra.mxu0 %v377
    %394 = vmatprep.subr.bf16.mxu0 0
    %395 = vmatpush1.bf16.msra.mxu0 %v376
    %396 = vmatprep.subr.bf16.mxu0 0
    %397 = vmatpush1.bf16.msra.mxu0 %v375
    %398 = vmatprep.subr.bf16.mxu0 0
    %399 = vmatpush1.bf16.msra.mxu0 %v374
    %400 = vmatprep.subr.bf16.mxu0 0
    %401 = vmatpush1.bf16.msra.mxu0 %v373
    %402 = vmatprep.subr.bf16.mxu0 0
    %403 = vmatpush1.bf16.msra.mxu0 %v372
    %404 = vmatprep.subr.bf16.mxu0 0
    %405 = vmatpush2.bf16.msra.mxu0 0
    %406 = vmatprep.subr.bf16.mxu0 0
    %407 = vmatpush2.bf16.msra.mxu0 0
    %408 = vmatprep.subr.bf16.mxu0 0
    %409 = vmatpush2.bf16.msra.mxu0 0
    %410 = vmatprep.subr.bf16.mxu0 0
    %411 = vmatpush2.bf16.msra.mxu0 0
    %412 = vmatprep.subr.bf16.mxu0 0
    %413 = vmatpush2.bf16.msra.mxu0 0
    %414 = vmatprep.subr.bf16.mxu0 0
    %415 = vmatpush2.bf16.msra.mxu0 0
    %416 = vmatprep.subr.bf16.mxu0 0
    %417 = vmatpush2.bf16.msra.mxu0 0
    %418 = vmatprep.subr.bf16.mxu0 0
    %419 = vmatpush2.bf16.msra.mxu0 0
    %420 = vmatprep.mubr.bf16.mxu0 0
    %421 = vmatmul.mubr.bf16.gmra.mxu0 %v317
    %v422 = vpop.f32.mrf.mxu0
    %v423 = vadd.f32 %v338, %v422
    %v424 = vpop.f32.mrf.mxu0
    %v425 = vpop.f32.mrf.mxu0
    %v426 = vadd.f32 %v338, %v425
    %v427 = vpop.f32.mrf.mxu0
    %428 = vdwg.mxu0
    %v429 = vmax.f32 %v423, 0.0
    %v430 = vmax.f32 %v426, 0.0
    %v431 = vpack.c.bf16 %v430, %v429
    %v432 = vld [vmem:[%s4] sm:$0xf]
    %v433 = vld [vmem:[%s4 + $0x4] sm:$0xf]
    %v434 = vld [vmem:[%s4 + $0x8] sm:$0xf]
    %v435 = vld [vmem:[%s4 + $0xc] sm:$0xf]
    %v436 = vld [vmem:[%s4 + $0x10] sm:$0xf]
    %v437 = vld [vmem:[%s4 + $0x14] sm:$0xf]
    %v438 = vld [vmem:[%s4 + $0x18] sm:$0xf]
    %v439 = vld [vmem:[%s4 + $0x1c] sm:$0xf]
    %s440 = sld [smem:[#allocation2]]
    %v441 = vstv %s440
    %v450 = vunpack.c.l.b16 %v432
    %v451 = vunpack.c.l.b16 %v433
    %v452 = vunpack.c.l.b16 %v434
    %v453 = vunpack.c.l.b16 %v435
    %v454 = vunpack.c.l.b16 %v436
    %v455 = vunpack.c.l.b16 %v437
    %v456 = vunpack.c.l.b16 %v438
    %v457 = vunpack.c.l.b16 %v439
    %v458 = vpack.c.b16 %v451, %v450
    %v459 = vpack.c.b16 %v453, %v452
    %v460 = vpack.c.b16 %v455, %v454
    %v461 = vpack.c.b16 %v457, %v456
    %vm466 = vcmask 523264
    %v468 = vsel %vm466, %v431, 0
    %470 = vmatprep.subr.bf16.mxu0 0
    %471 = vmatpush1.bf16.msra.mxu0 0
    %472 = vmatprep.subr.bf16.mxu0 0
    %473 = vmatpush1.bf16.msra.mxu0 0
    %474 = vmatprep.subr.bf16.mxu0 0
    %475 = vmatpush1.bf16.msra.mxu0 0
    %476 = vmatprep.subr.bf16.mxu0 0
    %477 = vmatpush1.bf16.msra.mxu0 0
    %478 = vmatprep.subr.bf16.mxu0 0
    %479 = vmatpush1.bf16.msra.mxu0 %v461
    %480 = vmatprep.subr.bf16.mxu0 0
    %481 = vmatpush1.bf16.msra.mxu0 %v460
    %482 = vmatprep.subr.bf16.mxu0 0
    %483 = vmatpush1.bf16.msra.mxu0 %v459
    %484 = vmatprep.subr.bf16.mxu0 0
    %485 = vmatpush1.bf16.msra.mxu0 %v458
    %486 = vmatprep.subr.bf16.mxu0 0
    %487 = vmatpush2.bf16.msra.mxu0 0
    %488 = vmatprep.subr.bf16.mxu0 0
    %489 = vmatpush2.bf16.msra.mxu0 0
    %490 = vmatprep.subr.bf16.mxu0 0
    %491 = vmatpush2.bf16.msra.mxu0 0
    %492 = vmatprep.subr.bf16.mxu0 0
    %493 = vmatpush2.bf16.msra.mxu0 0
    %494 = vmatprep.subr.bf16.mxu0 0
    %495 = vmatpush2.bf16.msra.mxu0 0
    %496 = vmatprep.subr.bf16.mxu0 0
    %497 = vmatpush2.bf16.msra.mxu0 0
    %498 = vmatprep.subr.bf16.mxu0 0
    %499 = vmatpush2.bf16.msra.mxu0 0
    %500 = vmatprep.subr.bf16.mxu0 0
    %501 = vmatpush2.bf16.msra.mxu0 0
    %502 = vmatprep.mubr.bf16.mxu0 0
    %503 = vmatmul.mubr.bf16.gmra.mxu0 %v468
    %v504 = vpop.f32.mrf.mxu0
    %v505 = vadd.f32 %v441, %v504
    %v506 = vpop.f32.mrf.mxu0
    %v507 = vpop.f32.mrf.mxu0
    %v508 = vadd.f32 %v441, %v507
    %v509 = vpop.f32.mrf.mxu0
    %510 = vdwg.mxu0
    %vm511 = vcmask 64512
    %512 = vst.msk [vmem:[%s7] sm:$0xff] %vm511, %v505
    %513 = vst.msk [vmem:[%s7 + $0x8] sm:$0xff] %vm511, %v508
    // Predicated region
    $region38: #{tpu_custom_call.1} parent=1 // pred_check
      _
    $region39: #{tpu_custom_call.1} parent=1 // pred_check_branch
      %515 = sbr.rel (0) target = $region41
    $region40: #{tpu_custom_call.1} parent=1 // pred_region
      _
    $region41: #{tpu_custom_call.1} parent=1 // pred_fallthru
      _
    // Predicated region
    $region42: #{tpu_custom_call.1} parent=1 // pred_check
      _
    $region43: #{tpu_custom_call.1} parent=1 // pred_check_branch
      %517 = sbr.rel (0) target = $region45
    $region44: #{tpu_custom_call.1} parent=1 // pred_region
      _
    $region45: #{tpu_custom_call.1} parent=1 // pred_fallthru
      _
    %518 = vsyncpa [#allocation4], 1
    %519 = vsyncpa [#allocation6], 1

</llo_original>
